<compile_context>
chip_gen: v7x
topology: tpu7x:2x2x1
jax: 0.10.0
libtpu: 0.0.40
codegen_flags: <defaults>
</compile_context>

<pallas_src>
import numpy as np
import jax
import jax.numpy as jnp
from jax.experimental import pallas as pl
from jax.experimental.pallas import tpu as pltpu


# ----------------------------- Pallas kernel -----------------------------

def _add_pe_kernel(x_ref, pe_ref, o_ref):
    # x_ref / o_ref: (TB, S, D) VMEM tiles; pe_ref: (1, S, D) tile.
    # pe broadcasts over the TB axis; pure VPU add, lane-dense (D = 128).
    o_ref[...] = x_ref[...] + pe_ref[...]


def _pick_batch_tile(B, S):
    """Rows-of-128-lanes target ~1024 per block; keep >=2 grid steps if B>=2."""
    target_rows = 1024
    tb = max(1, min(B, target_rows // max(S, 1)))
    if B >= 2 and tb >= B:
        tb = max(1, B // 2)          # feed both v7x TensorCores
    while B % tb != 0:               # prefer even division (no ragged edge blocks)
        tb -= 1
    return tb


def positional_encoding_forward(x, pe, *, donate_x=False):
    """y = x + pe[:, :S, :].   x: (B, S, D), pe: (1, max_len, D)."""
    B, S, D = x.shape
    max_len = pe.shape[1]

    # Dtype passthrough: run the add in x.dtype (bf16 stays bf16).
    pe_in = pe if pe.dtype == x.dtype else pe.astype(x.dtype)

    # Feed the full pe buffer whenever the (1, S, D) block is legal against it
    # (last-two dims of the block must be multiples of (8, 128) or full dims).
    if S % 8 == 0 or S == max_len:
        pe_arg = pe_in                                   # no host-side copy
    else:
        pe_arg = jax.lax.slice(pe_in, (0, 0, 0), (1, S, D))  # fallback only

    TB = _pick_batch_tile(B, S)

    return pl.pallas_call(
        _add_pe_kernel,
        out_shape=jax.ShapeDtypeStruct((B, S, D), x.dtype),
        grid=(pl.cdiv(B, TB),),
        in_specs=[
            pl.BlockSpec((TB, S, D), lambda b: (b, 0, 0)),  # batch-tiled activations
            pl.BlockSpec((1, S, D), lambda b: (0, 0, 0)),   # same pe tile every step
        ],
        out_specs=pl.BlockSpec((TB, S, D), lambda b: (b, 0, 0)),
        input_output_aliases={0: 0} if donate_x else {},
        compiler_params=pltpu.CompilerParams(
            dimension_semantics=("parallel",)),
    )(x, pe_arg)


# --------------------------- buffer construction ---------------------------

def make_pe(d_model, max_len=500, dtype=jnp.float32):
    """Same math as the PyTorch __init__ (register_buffer 'pe')."""
    pe = np.zeros((max_len, d_model), dtype=np.float32)
    position = np.arange(0, max_len, dtype=np.float32)[:, None]
    div_term = np.exp(np.arange(0, d_model, 2, dtype=np.float32)
                      * -(np.log(10000.0) / d_model))
    pe[:, 0::2] = np.sin(position * div_term)
    pe[:, 1::2] = np.cos(position * div_term)
    return jnp.asarray(pe[None], dtype=dtype)  # (1, max_len, d_model)


# ----------------------------------- main -----------------------------------

if __name__ == "__main__":
    D_MODEL = 128
    MAX_LEN = 500
    SEQ_LEN = 8
    BATCH = 2

    key = jax.random.PRNGKey(0)
    x = jax.random.normal(key, (BATCH, SEQ_LEN, D_MODEL), jnp.float32)
    pe = make_pe(D_MODEL, MAX_LEN)

    fwd = jax.jit(positional_encoding_forward)
    y = jax.block_until_ready(fwd(x, pe))

    # Pure-JAX reference check (module semantics).
    ref = x + pe[:, :SEQ_LEN, :]
    assert y.shape == (BATCH, SEQ_LEN, D_MODEL)
    assert bool(jnp.all(jnp.isfinite(y)))
    assert bool(jnp.allclose(y, ref, atol=1e-6, rtol=1e-6))

    print("KERNEL_OK")
</pallas_src>

<mosaic_0001>
module attributes {stable_mosaic.version = 11 : i64} {
  func.func @_add_pe_kernel(%arg0: i32, %arg1: memref<1x8x128xf32, #tpu.memory_space<vmem>>, %arg2: memref<1x8x128xf32, #tpu.memory_space<vmem>>, %arg3: memref<1x8x128xf32, #tpu.memory_space<vmem>>) attributes {dimension_semantics = [#tpu.dimension_semantics<parallel>], iteration_bounds = array<i64: 2>, scalar_prefetch = 0 : i64, scratch_operands = 0 : i64, tpu.core_type = #tpu.core_type<tc>, window_params = [{transform_indices = @transform_0, window_bounds = array<i64: 1, 8, 128>}, {transform_indices = @transform_1, window_bounds = array<i64: 1, 8, 128>}, {transform_indices = @transform_2, window_bounds = array<i64: 1, 8, 128>}]} {
    %c0 = arith.constant 0 : index
    %c0_0 = arith.constant 0 : index
    %c0_1 = arith.constant 0 : index
    %0 = vector.load %arg1[%c0, %c0_0, %c0_1] : memref<1x8x128xf32, #tpu.memory_space<vmem>>, vector<1x8x128xf32>
    %c0_2 = arith.constant 0 : index
    %c0_3 = arith.constant 0 : index
    %c0_4 = arith.constant 0 : index
    %1 = vector.load %arg2[%c0_2, %c0_3, %c0_4] : memref<1x8x128xf32, #tpu.memory_space<vmem>>, vector<1x8x128xf32>
    %2 = arith.addf %0, %1 : vector<1x8x128xf32>
    %c0_5 = arith.constant 0 : index
    %c0_6 = arith.constant 0 : index
    %c0_7 = arith.constant 0 : index
    %3 = vector.load %arg3[%c0_5, %c0_6, %c0_7] : memref<1x8x128xf32, #tpu.memory_space<vmem>>, vector<1x8x128xf32>
    tpu.vector_store %arg3[%c0_5, %c0_6, %c0_7], %2 {strides = array<i32>} : memref<1x8x128xf32, #tpu.memory_space<vmem>>, vector<1x8x128xf32>,
    return
  }
  func.func @transform_0(%arg0: i32) -> (i32, i32, i32) {
    %c0_i32 = arith.constant 0 : i32
    %c0_i32_0 = arith.constant 0 : i32
    %c0_i32_1 = arith.constant 0 : i32
    return %arg0, %c0_i32, %c0_i32_0 : i32, i32, i32
  }
  func.func @transform_1(%arg0: i32) -> (i32, i32, i32) {
    %c0_i32 = arith.constant 0 : i32
    %c0_i32_0 = arith.constant 0 : i32
    %c0_i32_1 = arith.constant 0 : i32
    %c0_i32_2 = arith.constant 0 : i32
    return %c0_i32, %c0_i32_0, %c0_i32_1 : i32, i32, i32
  }
  func.func @transform_2(%arg0: i32) -> (i32, i32, i32) {
    %c0_i32 = arith.constant 0 : i32
    %c0_i32_0 = arith.constant 0 : i32
    %c0_i32_1 = arith.constant 0 : i32
    return %arg0, %c0_i32, %c0_i32_0 : i32, i32, i32
  }
}

</mosaic_0001>

<llo_original>
// kernel: positional_encoding_forward.1
$region0: #{positional_encoding_forward.1}
  #allocation0 [shape = 'u32[]', space=smem, size = 0x4, offset = 0x4, fixed_abs, tag = 'smem constant byte address 0x4 - core index']
  #allocation1 [shape = 'u32[144,128]{1,0:T(1,128)}', space=vmem, size = 0x12000, scoped, tag = 'internal scratch']
  %s0 = inlined_call_operand.vmem [shape: f32[2,8,128], index: 0, kind: input, shape index: {}]
  %s1 = inlined_call_operand.vmem [shape: f32[1,500,128], index: 1, kind: input, shape index: {}]
  %s2 = inlined_call_operand.hbm [shape: f32[2,8,128], index: 2, kind: output, shape index: {}]
  %s3 = sld [smem:[#allocation0]]
  $region41: #{positional_encoding_forward.1} parent=0
    _
  %s5 = ssub.s32 1, %s3
  %s6 = scalar_select 0, %s5, %s3
  $region1: #{positional_encoding_forward.1} parent=0
    #allocation2 [shape = 'u8[8192]{0}', space=vmem, size = 0x2000, scoped, tag = 'output window, operand 0']
    #allocation3 [shape = 's32[2]{0}', space=sflag, size = 0x8, scoped, tag = 'scoped memory for positional_encoding_forward.1']
    %7 = vsyncpa [#allocation3], 0
    %s8 = scalar_lea.sflag [#allocation3], 1
    %9 = vsyncpa %s8, 0
    loop: start=0, step=1, limit=4
    $region2: #{positional_encoding_forward.1} parent=1 // loop_pre_header
      _
    $region3: #{positional_encoding_forward.1} parent=1 // loop_header
      %s11 = sphi 0, %s15
      %p12 = scmp.ge.s32.totalorder %s11, 4
      %s21 = sphi 0, %s23
      %s24 = sphi 0, %s21
      %s25 = sphi 0, %s24
      %s41 = sphi 0, %s25
      %s45 = sphi 0, %s45
      %s47 = sphi 0, %s45
      %s48 = sphi 0, %s47
      %s62 = sphi 0, %s48
      %s68 = sphi 0, %s70
      %s71 = sphi 0, %s68
      %s72 = sphi 0, %s71
      %s88 = sphi 0, %s72
    $region4: #{positional_encoding_forward.1} parent=1 // loop_header_branch
      %14 = sbr.rel (%p12) target = $region8
    $region5: #{positional_encoding_forward.1} parent=1 // loop_body
      %s16 = ssub.s32 %s11, 1
      %s17 = ssub.s32 %s11, 2
      %s18 = sadd.s32 %s11, 1
      %s19 = ssub.s32 %s11, %s18
      %p20 = scmp.eq.s32.totalorder %s19, 0
      %s22 = sadd.s32 %s21, 1
      %s23 = scalar_select %p20, %s21, %s22
      %p26 = pneg %p20
      %p27 = scmp.eq.s32.totalorder %s11, 1
      %p28 = por %p26, %p27
      %p29 = scmp.ne.s32.totalorder %s21, %s24
      %p30 = scmp.eq.s32.totalorder %s11, 0
      %p31 = por %p29, %p30
      %p32 = scmp.ne.s32.totalorder %s21, %s24
      %p33 = scmp.eq.s32.totalorder %s16, 1
      %p34 = por %p32, %p33
      %p35 = scmp.ne.s32.totalorder %s24, %s25
      %p36 = scmp.eq.s32.totalorder %s16, 0
      %p37 = por %p35, %p36
      %p38 = scmp.ne.s32.totalorder %s24, %s25
      %p39 = scmp.eq.s32.totalorder %s17, 1
      %p40 = por %p38, %p39
      %p42 = scmp.ne.s32.totalorder %s25, %s41
      %p43 = scmp.eq.s32.totalorder %s17, 0
      %p44 = por %p42, %p43
      %s46 = sadd.s32 %s45, 1
      %p49 = scmp.eq.s32.totalorder %s11, 1
      %p50 = scmp.ne.s32.totalorder %s45, %s47
      %p51 = scmp.eq.s32.totalorder %s11, 0
      %p52 = por %p50, %p51
      %p53 = scmp.ne.s32.totalorder %s45, %s47
      %p54 = scmp.eq.s32.totalorder %s16, 1
      %p55 = por %p53, %p54
      %p56 = scmp.ne.s32.totalorder %s47, %s48
      %p57 = scmp.eq.s32.totalorder %s16, 0
      %p58 = por %p56, %p57
      %p59 = scmp.ne.s32.totalorder %s47, %s48
      %p60 = scmp.eq.s32.totalorder %s17, 1
      %p61 = por %p59, %p60
      %p63 = scmp.ne.s32.totalorder %s48, %s62
      %p64 = scmp.eq.s32.totalorder %s17, 0
      %p65 = por %p63, %p64
      %s66 = ssub.s32 %s11, %s18
      %p67 = scmp.eq.s32.totalorder %s66, 0
      %s69 = sadd.s32 %s68, 1
      %s70 = scalar_select %p67, %s68, %s69
      %p73 = pneg %p67
      %p74 = scmp.eq.s32.totalorder %s11, 1
      %p75 = por %p73, %p74
      %p76 = scmp.ne.s32.totalorder %s68, %s71
      %p77 = scmp.eq.s32.totalorder %s11, 0
      %p78 = por %p76, %p77
      %p79 = scmp.ne.s32.totalorder %s68, %s71
      %p80 = scmp.eq.s32.totalorder %s16, 1
      %p81 = por %p79, %p80
      %p82 = scmp.ne.s32.totalorder %s71, %s72
      %p83 = scmp.eq.s32.totalorder %s16, 0
      %p84 = por %p82, %p83
      %p85 = scmp.ne.s32.totalorder %s71, %s72
      %p86 = scmp.eq.s32.totalorder %s17, 1
      %p87 = por %p85, %p86
      %p89 = scmp.ne.s32.totalorder %s72, %s88
      %p90 = scmp.eq.s32.totalorder %s17, 0
      %p91 = por %p89, %p90
      %p92 = scmp.le.s32.totalorder 1, %s11
      %p93 = scmp.lt.s32.totalorder %s11, 3
      %p94 = pnand %p92, %p93
      %p95 = pneg %p94
      // Predicated region
      $region9: #{positional_encoding_forward.1} parent=5 // pred_check
        _
      $region10: #{positional_encoding_forward.1} parent=5 // pred_check_branch
        %97 = sbr.rel (%p94) target = $region12
      $region11: #{positional_encoding_forward.1} parent=5 // pred_region
        %s98 = ssub.s32 %s11, 1
        // Predicated region
        $region13: #{positional_encoding_forward.1} parent=11 // pred_check
          %p99 = pneg %p58
        $region14: #{positional_encoding_forward.1} parent=11 // pred_check_branch
          %101 = sbr.rel (%p99) target = $region16
        $region15: #{positional_encoding_forward.1} parent=11 // pred_region
          _
        $region16: #{positional_encoding_forward.1} parent=11 // pred_fallthru
          _
      $region12: #{positional_encoding_forward.1} parent=5 // pred_fallthru
        _
      %p102 = scmp.lt.s32.totalorder %s11, 2
      // Predicated region
      $region17: #{positional_encoding_forward.1} parent=5 // pred_check
        %p103 = pneg %p102
      $region18: #{positional_encoding_forward.1} parent=5 // pred_check_branch
        %105 = sbr.rel (%p103) target = $region20
      $region19: #{positional_encoding_forward.1} parent=5 // pred_region
        // Predicated region
        $region21: #{positional_encoding_forward.1} parent=19 // pred_check
          %p106 = pneg %p31
        $region22: #{positional_encoding_forward.1} parent=19 // pred_check_branch
          %108 = sbr.rel (%p106) target = $region24
        $region23: #{positional_encoding_forward.1} parent=19 // pred_region
          %p109 = scmp.lt.s32.totalorder %s11, 1
          %s110 = scalar_select %p109, %s11, 1
          %s111 = smul.addr %s110, 8
          %s112 = scalar_lea.vmem %s0, %s111
        $region24: #{positional_encoding_forward.1} parent=19 // pred_fallthru
          _
      $region20: #{positional_encoding_forward.1} parent=5 // pred_fallthru
        _
      %p113 = scmp.le.s32.totalorder 1, %s11
      %p114 = scmp.lt.s32.totalorder %s11, 3
      %p115 = pnand %p113, %p114
      %p116 = pneg %p115
      // Predicated region
      $region25: #{positional_encoding_forward.1} parent=5 // pred_check
        _
      $region26: #{positional_encoding_forward.1} parent=5 // pred_check_branch
        %118 = sbr.rel (%p115) target = $region28
      $region27: #{positional_encoding_forward.1} parent=5 // pred_region
        %s119 = ssub.s32 %s11, 1
        %p120 = scmp.lt.s32.totalorder %s16, 1
        %s121 = scalar_select %p120, %s16, 1
        %s122 = smul.addr %s121, 8
        %s123 = scalar_lea.vmem %s0, %s122
        %p124 = pneg %p37
        %p125 = pneg %p34
        %p126 = pneg %p58
        %p127 = pneg %p55
        %p128 = pneg %p84
        %p129 = pneg %p81
        %s130 = sand.u32 %s71, 1
        %s131 = scalar_lea.sflag [#allocation3], %s130
        %s132 = sand.u32 %s71, 1
        %s133 = smul.addr %s132, 8
        %s134 = scalar_lea.vmem [#allocation2], %s133
        %p135 = scmp.lt.s32.totalorder %s16, 1
        %s136 = scalar_select %p135, %s16, 1
        %s137 = smul.addr %s136, 8
        %s138 = scalar_lea.vmem %s0, %s137
        %v139 = vld [vmem:[%s138] sm:$0xff]
        %v140 = vld [vmem:[%s1] sm:$0xff]
        %v141 = vadd.f32 %v139, %v140
        %142 = vst [vmem:[%s134] sm:$0xff] %v141
        %s143 = sand.u32 %s71, 1
        %s144 = scalar_lea.sflag [#allocation3], %s143
        %s145 = sand.u32 %s71, 1
        %s146 = smul.addr %s145, 8
        %s147 = scalar_lea.vmem [#allocation2], %s146
        // Predicated region
        $region29: #{positional_encoding_forward.1} parent=27 // pred_check
          %p148 = pneg %p81
        $region30: #{positional_encoding_forward.1} parent=27 // pred_check_branch
          %150 = sbr.rel (%p148) target = $region32
        $region31: #{positional_encoding_forward.1} parent=27 // pred_region
          %s152 = ssub.s32 128, 128
          %153 = vsyncadd %s144, %s152
          %s154 = smul.addr %s16, 128
          %s155 = scalar_lea.hbm %s2, %s154
          %s157 = sshll.u32 %s147, 4
          %s158 = int_to_ptr.vmem [resolvable:$true] %s157
          %160 = dma.vmem_to_hbm [thread:$0]  %s158, 128, %s155, %s144
        $region32: #{positional_encoding_forward.1} parent=27 // pred_fallthru
          _
      $region28: #{positional_encoding_forward.1} parent=5 // pred_fallthru
        _
      %p161 = scmp.le.s32.totalorder 2, %s11
      // Predicated region
      $region33: #{positional_encoding_forward.1} parent=5 // pred_check
        %p162 = pneg %p161
      $region34: #{positional_encoding_forward.1} parent=5 // pred_check_branch
        %164 = sbr.rel (%p162) target = $region36
      $region35: #{positional_encoding_forward.1} parent=5 // pred_region
        %s165 = ssub.s32 %s11, 2
        // Predicated region
        $region37: #{positional_encoding_forward.1} parent=35 // pred_check
          %p166 = pneg %p87
        $region38: #{positional_encoding_forward.1} parent=35 // pred_check_branch
          %168 = sbr.rel (%p166) target = $region40
        $region39: #{positional_encoding_forward.1} parent=35 // pred_region
          %s169 = sand.u32 %s72, 1
          %s170 = scalar_lea.sflag [#allocation3], %s169
          %s171 = sand.u32 %s72, 1
          %s172 = smul.addr %s171, 8
          %s173 = scalar_lea.vmem [#allocation2], %s172
          %174 = dma.done %s170, 128
        $region40: #{positional_encoding_forward.1} parent=35 // pred_fallthru
          _
      $region36: #{positional_encoding_forward.1} parent=5 // pred_fallthru
        _
    $region6: #{positional_encoding_forward.1} parent=1 // loop_footer
      %s15 = sadd.s32 1, %s11
    $region7: #{positional_encoding_forward.1} parent=1 // loop_footer_branch
      %10 = sbr.rel target = $region3
    $region8: #{positional_encoding_forward.1} parent=1 // loop_exit
      _
    %175 = vsyncpa [#allocation3], 1
    %s176 = scalar_lea.sflag [#allocation3], 1
    %177 = vsyncpa %s176, 1

</llo_original>
